<compile_context>
chip_gen: v5e
topology: v5e:2x2
jax: 0.10.0
libtpu: 0.0.40
codegen_flags: <defaults>
</compile_context>

<pallas_src>
import jax
import jax.numpy as jnp
from jax.experimental import pallas as pl
from jax.experimental.pallas import tpu as pltpu

_EPS = 1e-8
_LANE = 1024            # lane-dense slab width (multiple of 128)
_MAX_BLOCK_ROWS = 512   # 512 * 1024 * 4 B = 2 MiB per operand block


def _sigmoid(x):
    # Single EUP push (tanh) instead of exp + divide.
    return 0.5 * (jnp.tanh(0.5 * x) + 1.0)


def _rebar_math(logits, u, vp, inv_tau):
    """Elementwise REBAR forward math (mirrors the torch module)."""
    # z = reparameterize(logits, u);  u in [0,1) so only the eps floor matters.
    log_u = jnp.log(jnp.maximum(u, _EPS))
    log_1mu = jnp.log(jnp.maximum(1.0 - u, _EPS))
    z = logits + log_u - log_1mu
    # s = (z > 0).float()
    pos = z > 0.0
    s = pos.astype(jnp.float32)
    # v = v_from_u(u, logits, force_same=False, b=s, v_prime=vp)
    u_prime = _sigmoid(-logits)
    v = jnp.where(pos, u_prime + vp * (1.0 - u_prime), vp * u_prime)
    # z_tilde = reparameterize(logits, v); keep the full torch clamp on v, 1-v.
    log_v = jnp.log(jnp.clip(v, _EPS, 1.0))
    log_1mv = jnp.log(jnp.clip(1.0 - v, _EPS, 1.0))
    z_tilde = logits + log_v - log_1mv
    # concrete relaxation sigmoid(. / tau0)
    sig_z = _sigmoid(z * inv_tau)
    sig_zt = _sigmoid(z_tilde * inv_tau)
    return sig_z, s, sig_zt


def _rebar_kernel(inv_tau_ref, logits_ref, u_ref, vp_ref,
                  sig_z_ref, s_ref, sig_zt_ref):
    sig_z, s, sig_zt = _rebar_math(logits_ref[...], u_ref[...], vp_ref[...],
                                   inv_tau_ref[0])
    sig_z_ref[...] = sig_z
    s_ref[...] = s
    sig_zt_ref[...] = sig_zt


def _choose_block_rows(rows):
    """Largest block <= 2 MiB/operand; >=2 grid steps for v7x megacore."""
    if rows <= 8:
        return rows                      # full-extent block (tiny input)
    half = -(-rows // 2)                 # ceil(rows / 2)
    half = -(-half // 8) * 8             # round up to a multiple of 8
    return min(half, _MAX_BLOCK_ROWS)


def rebar_bernoulli_sampler(logits, tau0, key=None, *, u=None, v_p=None):
    """Returns [sig_z, s, sig_z_tilde], each with logits' shape (float32).

    If u / v_p are not supplied, uniform noise is drawn from `key` (matching
    the torch module, which draws torch.rand in forward()).
    """
    orig_shape = logits.shape
    n = logits.size
    inv_tau_f = 1.0 / float(tau0)

    if u is None or v_p is None:
        if key is None:
            raise ValueError("provide `key` or explicit (u, v_p)")
        ku, kv = jax.random.split(key)
        u = jax.random.uniform(ku, orig_shape, dtype=jnp.float32)
        v_p = jax.random.uniform(kv, orig_shape, dtype=jnp.float32)

    lg = logits.reshape(-1).astype(jnp.float32)
    uu = u.reshape(-1).astype(jnp.float32)
    vv = v_p.reshape(-1).astype(jnp.float32)

    n_main = (n // _LANE) * _LANE
    rows = n_main // _LANE

    main_flat = None
    if rows > 0:
        lg_m = lg[:n_main].reshape(rows, _LANE)
        u_m = uu[:n_main].reshape(rows, _LANE)
        v_m = vv[:n_main].reshape(rows, _LANE)

        block_rows = _choose_block_rows(rows)
        grid = (pl.cdiv(rows, block_rows),)
        blk = pl.BlockSpec((block_rows, _LANE), lambda i: (i, 0))
        smem = pl.BlockSpec(memory_space=pltpu.MemorySpace.SMEM)
        out_sds = jax.ShapeDtypeStruct((rows, _LANE), jnp.float32)
        inv_tau = jnp.asarray([inv_tau_f], dtype=jnp.float32)

        cost = pl.CostEstimate(flops=30 * n_main,
                               transcendentals=7 * n_main,
                               bytes_accessed=24 * n_main)

        main_outs = pl.pallas_call(
            _rebar_kernel,
            out_shape=(out_sds, out_sds, out_sds),
            grid=grid,
            in_specs=[smem, blk, blk, blk],
            out_specs=(blk, blk, blk),
            compiler_params=pltpu.CompilerParams(
                dimension_semantics=("parallel",),
                vmem_limit_bytes=32 * 1024 * 1024),
            cost_estimate=cost,
        )(inv_tau, lg_m, u_m, v_m)
        main_flat = [o.reshape(-1) for o in main_outs]

    tail_flat = None
    if n_main < n:
        # <1024-element tail: same math in plain JAX, no padding / HBM copies.
        tail_flat = list(_rebar_math(lg[n_main:], uu[n_main:], vv[n_main:],
                                     inv_tau_f))

    if main_flat is None:
        flats = tail_flat
    elif tail_flat is None:
        flats = main_flat
    else:
        flats = [jnp.concatenate([a, b]) for a, b in zip(main_flat, tail_flat)]

    return [f.reshape(orig_shape) for f in flats]


def _reference(logits, u, v_p, tau0):
    # Pure-JAX reference mirroring the torch module (force_same=False path).
    def safe_log_prob(x):
        return jnp.log(jnp.clip(x, _EPS, 1.0))
    z = logits + safe_log_prob(u) - safe_log_prob(1.0 - u)
    s = (z > 0.0).astype(jnp.float32)
    u_prime = jax.nn.sigmoid(-logits)
    v = s * (u_prime + v_p * (1.0 - u_prime)) + (1.0 - s) * v_p * u_prime
    z_tilde = logits + safe_log_prob(v) - safe_log_prob(1.0 - v)
    return [jax.nn.sigmoid(z / tau0), s, jax.nn.sigmoid(z_tilde / tau0)]


if __name__ == "__main__":
    key = jax.random.PRNGKey(0)
    k_logits, k_u, k_vp, k_noise = jax.random.split(key, 4)

    shape = (2, 4, 16, 16)   # batch=2, channels=4, spatial=16x16
    tau0 = 0.5

    logits = jax.random.normal(k_logits, shape, dtype=jnp.float32)

    # --- exact check of the elementwise math vs a pure-JAX reference -------
    u = jax.random.uniform(k_u, shape, dtype=jnp.float32,
                           minval=1e-6, maxval=1.0 - 1e-6)
    v_p = jax.random.uniform(k_vp, shape, dtype=jnp.float32,
                             minval=1e-6, maxval=1.0 - 1e-6)
    got = jax.block_until_ready(
        rebar_bernoulli_sampler(logits, tau0, u=u, v_p=v_p))
    want = _reference(logits, u, v_p, tau0)
    for g, w in zip(got, want):
        assert g.shape == shape and g.dtype == jnp.float32
        assert float(jnp.max(jnp.abs(g - w))) < 2e-5

    # --- default path: noise drawn from the key (matches the torch module) -
    sig_z, s, sig_zt = jax.block_until_ready(
        rebar_bernoulli_sampler(logits, tau0, key=k_noise))
    for o in (sig_z, s, sig_zt):
        assert o.shape == shape and o.dtype == jnp.float32
        assert bool(jnp.all(jnp.isfinite(o)))
    # hard sample is binary, relaxations live in [0, 1]
    assert bool(jnp.all((s == 0.0) | (s == 1.0)))
    assert bool(jnp.all((sig_z >= 0.0) & (sig_z <= 1.0)))
    assert bool(jnp.all((sig_zt >= 0.0) & (sig_zt <= 1.0)))
    # REBAR consistency: s, sigmoid(z/tau) and sigmoid(z_tilde/tau) agree on
    # which side of 0.5 they fall (same hard sample).
    tol = 1e-4
    assert bool(jnp.all(jnp.where(s == 1.0, sig_z >= 0.5 - tol,
                                  sig_z <= 0.5 + tol)))
    assert bool(jnp.all(jnp.where(s == 1.0, sig_zt >= 0.5 - tol,
                                  sig_zt <= 0.5 + tol)))
    # deterministic w.r.t. the key
    rerun = jax.block_until_ready(
        rebar_bernoulli_sampler(logits, tau0, key=k_noise))
    for a, b in zip((sig_z, s, sig_zt), rerun):
        assert bool(jnp.all(a == b))

    # --- ragged-size path: aligned prefix in-kernel + pure-JAX tail --------
    rag_shape = (3, 7, 11)   # 231 elements, not a multiple of 1024
    rag_logits = jax.random.normal(k_logits, rag_shape, dtype=jnp.float32)
    rag_u = jax.random.uniform(k_u, rag_shape, dtype=jnp.float32,
                               minval=1e-6, maxval=1.0 - 1e-6)
    rag_vp = jax.random.uniform(k_vp, rag_shape, dtype=jnp.float32,
                                minval=1e-6, maxval=1.0 - 1e-6)
    rag_got = jax.block_until_ready(
        rebar_bernoulli_sampler(rag_logits, tau0, u=rag_u, v_p=rag_vp))
    rag_want = _reference(rag_logits, rag_u, rag_vp, tau0)
    for g, w in zip(rag_got, rag_want):
        assert g.shape == rag_shape
        assert float(jnp.max(jnp.abs(g - w))) < 2e-5

    print("KERNEL_OK")
</pallas_src>

<mosaic_0001>
module attributes {stable_mosaic.version = 11 : i64} {
  func.func @_rebar_kernel(%arg0: i32, %arg1: memref<1xf32, #tpu.memory_space<smem>>, %arg2: memref<2x1024xf32, #tpu.memory_space<vmem>>, %arg3: memref<2x1024xf32, #tpu.memory_space<vmem>>, %arg4: memref<2x1024xf32, #tpu.memory_space<vmem>>, %arg5: memref<2x1024xf32, #tpu.memory_space<vmem>>, %arg6: memref<2x1024xf32, #tpu.memory_space<vmem>>, %arg7: memref<2x1024xf32, #tpu.memory_space<vmem>>) attributes {dimension_semantics = [#tpu.dimension_semantics<parallel>], iteration_bounds = array<i64: 1>, scalar_prefetch = 0 : i64, scratch_operands = 0 : i64, tpu.core_type = #tpu.core_type<tc>, window_params = [{transform_indices = @transform_0, window_bounds = array<i64: 1>}, {transform_indices = @transform_1, window_bounds = array<i64: 2, 1024>}, {transform_indices = @transform_2, window_bounds = array<i64: 2, 1024>}, {transform_indices = @transform_3, window_bounds = array<i64: 2, 1024>}, {transform_indices = @transform_4, window_bounds = array<i64: 2, 1024>}, {transform_indices = @transform_5, window_bounds = array<i64: 2, 1024>}, {transform_indices = @transform_6, window_bounds = array<i64: 2, 1024>}]} {
    %c0 = arith.constant 0 : index
    %c0_0 = arith.constant 0 : index
    %0 = vector.load %arg2[%c0, %c0_0] : memref<2x1024xf32, #tpu.memory_space<vmem>>, vector<2x1024xf32>
    %c0_1 = arith.constant 0 : index
    %c0_2 = arith.constant 0 : index
    %1 = vector.load %arg3[%c0_1, %c0_2] : memref<2x1024xf32, #tpu.memory_space<vmem>>, vector<2x1024xf32>
    %c0_3 = arith.constant 0 : index
    %c0_4 = arith.constant 0 : index
    %2 = vector.load %arg4[%c0_3, %c0_4] : memref<2x1024xf32, #tpu.memory_space<vmem>>, vector<2x1024xf32>
    %c0_5 = arith.constant 0 : index
    %3 = memref.load %arg1[%c0_5] : memref<1xf32, #tpu.memory_space<smem>>
    %cst = arith.constant 9.99999993E-9 : f32
    %4 = vector.broadcast %cst : f32 to vector<2x1024xf32>
    %5 = arith.maximumf %1, %4 : vector<2x1024xf32>
    %6 = math.log %5 : vector<2x1024xf32>
    %cst_6 = arith.constant 1.000000e+00 : f32
    %7 = vector.broadcast %cst_6 : f32 to vector<2x1024xf32>
    %8 = arith.subf %7, %1 : vector<2x1024xf32>
    %cst_7 = arith.constant 9.99999993E-9 : f32
    %9 = vector.broadcast %cst_7 : f32 to vector<2x1024xf32>
    %10 = arith.maximumf %8, %9 : vector<2x1024xf32>
    %11 = math.log %10 : vector<2x1024xf32>
    %12 = arith.addf %0, %6 : vector<2x1024xf32>
    %13 = arith.subf %12, %11 : vector<2x1024xf32>
    %cst_8 = arith.constant 0.000000e+00 : f32
    %14 = vector.broadcast %cst_8 : f32 to vector<2x1024xf32>
    %15 = arith.cmpf ogt, %13, %14 : vector<2x1024xf32>
    %16 = arith.extui %15 : vector<2x1024xi1> to vector<2x1024xi32>
    %17 = arith.sitofp %16 : vector<2x1024xi32> to vector<2x1024xf32>
    %cst_9 = arith.constant 0.000000e+00 : f32
    %18 = vector.broadcast %cst_9 : f32 to vector<2x1024xf32>
    %19 = arith.subf %18, %0 : vector<2x1024xf32>
    %cst_10 = arith.constant 5.000000e-01 : f32
    %20 = vector.broadcast %cst_10 : f32 to vector<2x1024xf32>
    %21 = arith.mulf %20, %19 : vector<2x1024xf32>
    %22 = math.tanh %21 : vector<2x1024xf32>
    %cst_11 = arith.constant 1.000000e+00 : f32
    %23 = vector.broadcast %cst_11 : f32 to vector<2x1024xf32>
    %24 = arith.addf %22, %23 : vector<2x1024xf32>
    %cst_12 = arith.constant 5.000000e-01 : f32
    %25 = vector.broadcast %cst_12 : f32 to vector<2x1024xf32>
    %26 = arith.mulf %25, %24 : vector<2x1024xf32>
    %cst_13 = arith.constant 1.000000e+00 : f32
    %27 = vector.broadcast %cst_13 : f32 to vector<2x1024xf32>
    %28 = arith.subf %27, %26 : vector<2x1024xf32>
    %29 = arith.mulf %2, %28 : vector<2x1024xf32>
    %30 = arith.addf %26, %29 : vector<2x1024xf32>
    %31 = arith.mulf %2, %26 : vector<2x1024xf32>
    %32 = arith.select %15, %30, %31 : vector<2x1024xi1>, vector<2x1024xf32>
    %cst_14 = arith.constant 9.99999993E-9 : f32
    %cst_15 = arith.constant 1.000000e+00 : f32
    %33 = vector.broadcast %cst_14 : f32 to vector<2x1024xf32>
    %34 = arith.maximumf %33, %32 : vector<2x1024xf32>
    %35 = vector.broadcast %cst_15 : f32 to vector<2x1024xf32>
    %36 = arith.minimumf %35, %34 : vector<2x1024xf32>
    %37 = math.log %36 : vector<2x1024xf32>
    %cst_16 = arith.constant 1.000000e+00 : f32
    %38 = vector.broadcast %cst_16 : f32 to vector<2x1024xf32>
    %39 = arith.subf %38, %32 : vector<2x1024xf32>
    %cst_17 = arith.constant 9.99999993E-9 : f32
    %cst_18 = arith.constant 1.000000e+00 : f32
    %40 = vector.broadcast %cst_17 : f32 to vector<2x1024xf32>
    %41 = arith.maximumf %40, %39 : vector<2x1024xf32>
    %42 = vector.broadcast %cst_18 : f32 to vector<2x1024xf32>
    %43 = arith.minimumf %42, %41 : vector<2x1024xf32>
    %44 = math.log %43 : vector<2x1024xf32>
    %45 = arith.addf %0, %37 : vector<2x1024xf32>
    %46 = arith.subf %45, %44 : vector<2x1024xf32>
    %47 = vector.broadcast %3 : f32 to vector<2x1024xf32>
    %48 = arith.mulf %13, %47 : vector<2x1024xf32>
    %cst_19 = arith.constant 5.000000e-01 : f32
    %49 = vector.broadcast %cst_19 : f32 to vector<2x1024xf32>
    %50 = arith.mulf %49, %48 : vector<2x1024xf32>
    %51 = math.tanh %50 : vector<2x1024xf32>
    %cst_20 = arith.constant 1.000000e+00 : f32
    %52 = vector.broadcast %cst_20 : f32 to vector<2x1024xf32>
    %53 = arith.addf %51, %52 : vector<2x1024xf32>
    %cst_21 = arith.constant 5.000000e-01 : f32
    %54 = vector.broadcast %cst_21 : f32 to vector<2x1024xf32>
    %55 = arith.mulf %54, %53 : vector<2x1024xf32>
    %56 = vector.broadcast %3 : f32 to vector<2x1024xf32>
    %57 = arith.mulf %46, %56 : vector<2x1024xf32>
    %cst_22 = arith.constant 5.000000e-01 : f32
    %58 = vector.broadcast %cst_22 : f32 to vector<2x1024xf32>
    %59 = arith.mulf %58, %57 : vector<2x1024xf32>
    %60 = math.tanh %59 : vector<2x1024xf32>
    %cst_23 = arith.constant 1.000000e+00 : f32
    %61 = vector.broadcast %cst_23 : f32 to vector<2x1024xf32>
    %62 = arith.addf %60, %61 : vector<2x1024xf32>
    %cst_24 = arith.constant 5.000000e-01 : f32
    %63 = vector.broadcast %cst_24 : f32 to vector<2x1024xf32>
    %64 = arith.mulf %63, %62 : vector<2x1024xf32>
    %c0_25 = arith.constant 0 : index
    %c0_26 = arith.constant 0 : index
    %65 = vector.load %arg5[%c0_25, %c0_26] : memref<2x1024xf32, #tpu.memory_space<vmem>>, vector<2x1024xf32>
    tpu.vector_store %arg5[%c0_25, %c0_26], %55 {strides = array<i32>} : memref<2x1024xf32, #tpu.memory_space<vmem>>, vector<2x1024xf32>,
    %c0_27 = arith.constant 0 : index
    %c0_28 = arith.constant 0 : index
    %66 = vector.load %arg6[%c0_27, %c0_28] : memref<2x1024xf32, #tpu.memory_space<vmem>>, vector<2x1024xf32>
    tpu.vector_store %arg6[%c0_27, %c0_28], %17 {strides = array<i32>} : memref<2x1024xf32, #tpu.memory_space<vmem>>, vector<2x1024xf32>,
    %c0_29 = arith.constant 0 : index
    %c0_30 = arith.constant 0 : index
    %67 = vector.load %arg7[%c0_29, %c0_30] : memref<2x1024xf32, #tpu.memory_space<vmem>>, vector<2x1024xf32>
    tpu.vector_store %arg7[%c0_29, %c0_30], %64 {strides = array<i32>} : memref<2x1024xf32, #tpu.memory_space<vmem>>, vector<2x1024xf32>,
    return
  }
  func.func @transform_0(%arg0: i32) -> i32 {
    %c0_i32 = arith.constant 0 : i32
    %c0_i32_0 = arith.constant 0 : i32
    return %c0_i32 : i32
  }
  func.func @transform_1(%arg0: i32) -> (i32, i32) {
    %c0_i32 = arith.constant 0 : i32
    %c0_i32_0 = arith.constant 0 : i32
    return %arg0, %c0_i32 : i32, i32
  }
  func.func @transform_2(%arg0: i32) -> (i32, i32) {
    %c0_i32 = arith.constant 0 : i32
    %c0_i32_0 = arith.constant 0 : i32
    return %arg0, %c0_i32 : i32, i32
  }
  func.func @transform_3(%arg0: i32) -> (i32, i32) {
    %c0_i32 = arith.constant 0 : i32
    %c0_i32_0 = arith.constant 0 : i32
    return %arg0, %c0_i32 : i32, i32
  }
  func.func @transform_4(%arg0: i32) -> (i32, i32) {
    %c0_i32 = arith.constant 0 : i32
    %c0_i32_0 = arith.constant 0 : i32
    return %arg0, %c0_i32 : i32, i32
  }
  func.func @transform_5(%arg0: i32) -> (i32, i32) {
    %c0_i32 = arith.constant 0 : i32
    %c0_i32_0 = arith.constant 0 : i32
    return %arg0, %c0_i32 : i32, i32
  }
  func.func @transform_6(%arg0: i32) -> (i32, i32) {
    %c0_i32 = arith.constant 0 : i32
    %c0_i32_0 = arith.constant 0 : i32
    return %arg0, %c0_i32 : i32, i32
  }
}

</mosaic_0001>

<llo_original>
// kernel: tpu_custom_call.1
$region0: #{tpu_custom_call.1}
  #allocation0 [shape = 'u32[]', space=smem, size = 0x4, offset = 0x4, fixed_abs, tag = 'smem constant byte address 0x4 - core index']
  #allocation1 [shape = 'u32[72,128]{1,0:T(1,128)}', space=vmem, size = 0x9000, scoped, tag = 'internal scratch']
  #allocation2 [shape = 'f32[1]{0:T(128)S(6)}', space=smem, size = 0x200, scoped, tag = 'scoped memory for tpu_custom_call.1']
  %s0 = inlined_call_operand.<no memory space> [shape: f32[1], index: 0, kind: input, shape index: {}]
  %s1 = inlined_call_operand.hbm [shape: f32[2,1024], index: 1, kind: input, shape index: {}]
  %s2 = inlined_call_operand.hbm [shape: f32[2,1024], index: 2, kind: input, shape index: {}]
  %s3 = inlined_call_operand.hbm [shape: f32[2,1024], index: 3, kind: input, shape index: {}]
  %s4 = inlined_call_operand.hbm [shape: f32[2,1024], index: 4, kind: output, shape index: {0}]
  %s5 = inlined_call_operand.hbm [shape: f32[2,1024], index: 5, kind: output, shape index: {1}]
  %s6 = inlined_call_operand.hbm [shape: f32[2,1024], index: 6, kind: output, shape index: {2}]
  %7 = xla_tuple %s4, %s5, %s6
  %s8 = sld [smem:[#allocation0]]
  $region54: #{tpu_custom_call.1} parent=0
    _
  %s10 = ssub.s32 1, %s8
  %s11 = scalar_select 0, %s10, %s8
  %12 = sst [smem:[#allocation2]] %s0
  $region1: #{tpu_custom_call.1} parent=0
    #allocation3 [shape = 'u8[8192]{0}', space=vmem, size = 0x2000, scoped, tag = 'input window, operand 1, single buffered']
    #allocation4 [shape = 's32[1]{0}', space=sflag, size = 0x4, scoped, tag = 'scoped memory for tpu_custom_call.1']
    #allocation5 [shape = 's32[1]{0}', space=sflag, size = 0x4, scoped, tag = 'scoped memory for tpu_custom_call.1']
    #allocation6 [shape = 'u8[8192]{0}', space=vmem, size = 0x2000, scoped, tag = 'input window, operand 2, single buffered']
    #allocation7 [shape = 's32[1]{0}', space=sflag, size = 0x4, scoped, tag = 'scoped memory for tpu_custom_call.1']
    #allocation8 [shape = 'u8[8192]{0}', space=vmem, size = 0x2000, scoped, tag = 'input window, operand 3, single buffered']
    #allocation9 [shape = 'u8[8192]{0}', space=vmem, size = 0x2000, scoped, tag = 'output window, operand 0, single buffered']
    #allocation10 [shape = 'u8[8192]{0}', space=vmem, size = 0x2000, scoped, tag = 'output window, operand 1, single buffered']
    #allocation11 [shape = 's32[1]{0}', space=sflag, size = 0x4, scoped, tag = 'scoped memory for tpu_custom_call.1']
    #allocation12 [shape = 'u8[8192]{0}', space=vmem, size = 0x2000, scoped, tag = 'output window, operand 2, single buffered']
    %13 = vsyncpa [#allocation4], 0
    %14 = vsyncpa [#allocation7], 0
    %15 = vsyncpa [#allocation5], 0
    %16 = vsyncpa [#allocation11], 0
    // Predicated region
    $region2: #{tpu_custom_call.1} parent=1 // pred_check
      _
    $region3: #{tpu_custom_call.1} parent=1 // pred_check_branch
      %18 = sbr.rel (0) target = $region5
    $region4: #{tpu_custom_call.1} parent=1 // pred_region
      _
    $region5: #{tpu_custom_call.1} parent=1 // pred_fallthru
      _
    // Predicated region
    $region6: #{tpu_custom_call.1} parent=1 // pred_check
      _
    $region7: #{tpu_custom_call.1} parent=1 // pred_check_branch
      %20 = sbr.rel (0) target = $region9
    $region8: #{tpu_custom_call.1} parent=1 // pred_region
      %22 = vsyncadd [#allocation4], 0
      %s24 = sshll.u32 %s1, 4
      %s25 = int_to_ptr.hbm [resolvable:$true] %s24
      %s26 = sshll.u32 [#allocation3], 4
      %s27 = int_to_ptr.vmem [resolvable:$true] %s26
      %29 = dma.hbm_to_vmem [thread:$0]  %s25, 256, %s27, [#allocation4]
    $region9: #{tpu_custom_call.1} parent=1 // pred_fallthru
      _
    // Predicated region
    $region10: #{tpu_custom_call.1} parent=1 // pred_check
      _
    $region11: #{tpu_custom_call.1} parent=1 // pred_check_branch
      %31 = sbr.rel (0) target = $region13
    $region12: #{tpu_custom_call.1} parent=1 // pred_region
      %33 = vsyncadd [#allocation7], 0
      %s35 = sshll.u32 %s2, 4
      %s36 = int_to_ptr.hbm [resolvable:$true] %s35
      %s37 = sshll.u32 [#allocation6], 4
      %s38 = int_to_ptr.vmem [resolvable:$true] %s37
      %40 = dma.hbm_to_vmem [thread:$0]  %s36, 256, %s38, [#allocation7]
    $region13: #{tpu_custom_call.1} parent=1 // pred_fallthru
      _
    // Predicated region
    $region14: #{tpu_custom_call.1} parent=1 // pred_check
      _
    $region15: #{tpu_custom_call.1} parent=1 // pred_check_branch
      %42 = sbr.rel (0) target = $region17
    $region16: #{tpu_custom_call.1} parent=1 // pred_region
      %44 = vsyncadd [#allocation7], 0
      %s46 = sshll.u32 %s3, 4
      %s47 = int_to_ptr.hbm [resolvable:$true] %s46
      %s48 = sshll.u32 [#allocation8], 4
      %s49 = int_to_ptr.vmem [resolvable:$true] %s48
      %51 = dma.hbm_to_vmem [thread:$0]  %s47, 256, %s49, [#allocation7]
    $region17: #{tpu_custom_call.1} parent=1 // pred_fallthru
      _
    // Predicated region
    $region18: #{tpu_custom_call.1} parent=1 // pred_check
      _
    $region19: #{tpu_custom_call.1} parent=1 // pred_check_branch
      %53 = sbr.rel (0) target = $region21
    $region20: #{tpu_custom_call.1} parent=1 // pred_region
      %55 = dma.done [#allocation4], 256
    $region21: #{tpu_custom_call.1} parent=1 // pred_fallthru
      _
    // Predicated region
    $region22: #{tpu_custom_call.1} parent=1 // pred_check
      _
    $region23: #{tpu_custom_call.1} parent=1 // pred_check_branch
      %57 = sbr.rel (0) target = $region25
    $region24: #{tpu_custom_call.1} parent=1 // pred_region
      %59 = dma.done [#allocation7], 256
    $region25: #{tpu_custom_call.1} parent=1 // pred_fallthru
      _
    // Predicated region
    $region26: #{tpu_custom_call.1} parent=1 // pred_check
      _
    $region27: #{tpu_custom_call.1} parent=1 // pred_check_branch
      %61 = sbr.rel (0) target = $region29
    $region28: #{tpu_custom_call.1} parent=1 // pred_region
      %63 = dma.done [#allocation7], 256
    $region29: #{tpu_custom_call.1} parent=1 // pred_fallthru
      _
    %v64 = vld [vmem:[#allocation3] sm:$0xff]
    %v65 = vld [vmem:[#allocation3 + $0x8] sm:$0xff]
    %v66 = vld [vmem:[#allocation6] sm:$0xff]
    %v67 = vld [vmem:[#allocation6 + $0x8] sm:$0xff]
    %v68 = vld [vmem:[#allocation8] sm:$0xff]
    %v69 = vld [vmem:[#allocation8 + $0x8] sm:$0xff]
    %s70 = sld [smem:[#allocation2]]
    %v71 = vmax.f32 %v66, 1e-08
    %v72 = vmax.f32 %v67, 1e-08
    %v73 = vlog2.pop %v71
    %v74 = vmul.f32 %v73, 0.6931472
    %v75 = vlog2.pop %v72
    %v76 = vmul.f32 %v75, 0.6931472
    %v77 = vsub.f32 1.0, %v66
    %v78 = vsub.f32 1.0, %v67
    %v79 = vmax.f32 %v77, 1e-08
    %v80 = vmax.f32 %v78, 1e-08
    %v81 = vlog2.pop %v79
    %v82 = vmul.f32 %v81, 0.6931472
    %v83 = vlog2.pop %v80
    %v84 = vmul.f32 %v83, 0.6931472
    %v85 = vadd.f32 %v64, %v74
    %v86 = vadd.f32 %v65, %v76
    %v87 = vsub.f32 %v85, %v82
    %v88 = vsub.f32 %v86, %v84
    %vm89 = vcmp.gt.f32.partialorder %v87, 0.0
    %vm90 = vcmp.gt.f32.partialorder %v88, 0.0
    %v91 = vsel %vm89, 1, 0
    %v92 = vsel %vm90, 1, 0
    %v93 = vcvt.s32.f32 %v91
    %v94 = vcvt.s32.f32 %v92
    %v95 = vsub.f32 0.0, %v64
    %v96 = vsub.f32 0.0, %v65
    %v97 = vmul.f32 %v95, 0.5
    %v98 = vmul.f32 %v96, 0.5
    %v99 = vtanh.pop %v97
    %v100 = vtanh.pop %v98
    %v101 = vadd.f32 %v99, 1.0
    %v102 = vadd.f32 %v100, 1.0
    %v103 = vmul.f32 %v101, 0.5
    %v104 = vmul.f32 %v102, 0.5
    %v105 = vsub.f32 1.0, %v103
    %v106 = vsub.f32 1.0, %v104
    %v107 = vmul.f32 %v68, %v105
    %v108 = vmul.f32 %v69, %v106
    %v109 = vadd.f32 %v103, %v107
    %v110 = vadd.f32 %v104, %v108
    %v111 = vmul.f32 %v68, %v103
    %v112 = vmul.f32 %v69, %v104
    %v113 = vsel %vm89, %v109, %v111
    %v114 = vsel %vm90, %v110, %v112
    %v115 = vmax.f32 %v113, 1e-08
    %v116 = vmax.f32 %v114, 1e-08
    %v117 = vmin.f32 %v115, 1.0
    %v118 = vmin.f32 %v116, 1.0
    %v119 = vlog2.pop %v117
    %v120 = vmul.f32 %v119, 0.6931472
    %v121 = vlog2.pop %v118
    %v122 = vmul.f32 %v121, 0.6931472
    %v123 = vsub.f32 1.0, %v113
    %v124 = vsub.f32 1.0, %v114
    %v125 = vmax.f32 %v123, 1e-08
    %v126 = vmax.f32 %v124, 1e-08
    %v127 = vmin.f32 %v125, 1.0
    %v128 = vmin.f32 %v126, 1.0
    %v129 = vlog2.pop %v127
    %v130 = vmul.f32 %v129, 0.6931472
    %v131 = vlog2.pop %v128
    %v132 = vmul.f32 %v131, 0.6931472
    %v133 = vadd.f32 %v64, %v120
    %v134 = vadd.f32 %v65, %v122
    %v135 = vsub.f32 %v133, %v130
    %v136 = vsub.f32 %v134, %v132
    %v137 = vstv %s70
    %v138 = vmul.f32 %v87, %v137
    %v139 = vmul.f32 %v88, %v137
    %v140 = vmul.f32 %v138, 0.5
    %v141 = vmul.f32 %v139, 0.5
    %v142 = vtanh.pop %v140
    %v143 = vtanh.pop %v141
    %v144 = vadd.f32 %v142, 1.0
    %v145 = vadd.f32 %v143, 1.0
    %v146 = vmul.f32 %v144, 0.5
    %v147 = vmul.f32 %v145, 0.5
    %v148 = vmul.f32 %v135, %v137
    %v149 = vmul.f32 %v136, %v137
    %v150 = vmul.f32 %v148, 0.5
    %v151 = vmul.f32 %v149, 0.5
    %v152 = vtanh.pop %v150
    %v153 = vtanh.pop %v151
    %v154 = vadd.f32 %v152, 1.0
    %v155 = vadd.f32 %v153, 1.0
    %v156 = vmul.f32 %v154, 0.5
    %v157 = vmul.f32 %v155, 0.5
    %158 = vst [vmem:[#allocation9] sm:$0xff] %v146
    %159 = vst [vmem:[#allocation9 + $0x8] sm:$0xff] %v147
    %160 = vst [vmem:[#allocation10] sm:$0xff] %v93
    %161 = vst [vmem:[#allocation10 + $0x8] sm:$0xff] %v94
    %162 = vst [vmem:[#allocation12] sm:$0xff] %v156
    %163 = vst [vmem:[#allocation12 + $0x8] sm:$0xff] %v157
    // Predicated region
    $region30: #{tpu_custom_call.1} parent=1 // pred_check
      _
    $region31: #{tpu_custom_call.1} parent=1 // pred_check_branch
      %165 = sbr.rel (0) target = $region33
    $region32: #{tpu_custom_call.1} parent=1 // pred_region
      %167 = vsyncadd [#allocation5], 0
      %s169 = sshll.u32 [#allocation9], 4
      %s170 = int_to_ptr.vmem [resolvable:$true] %s169
      %s171 = sshll.u32 %s4, 4
      %s172 = int_to_ptr.hbm [resolvable:$true] %s171
      %174 = dma.vmem_to_hbm [thread:$0]  %s170, 256, %s172, [#allocation5]
    $region33: #{tpu_custom_call.1} parent=1 // pred_fallthru
      _
    // Predicated region
    $region34: #{tpu_custom_call.1} parent=1 // pred_check
      _
    $region35: #{tpu_custom_call.1} parent=1 // pred_check_branch
      %176 = sbr.rel (0) target = $region37
    $region36: #{tpu_custom_call.1} parent=1 // pred_region
      %178 = vsyncadd [#allocation11], 0
      %s180 = sshll.u32 [#allocation10], 4
      %s181 = int_to_ptr.vmem [resolvable:$true] %s180
      %s182 = sshll.u32 %s5, 4
      %s183 = int_to_ptr.hbm [resolvable:$true] %s182
      %185 = dma.vmem_to_hbm [thread:$0]  %s181, 256, %s183, [#allocation11]
    $region37: #{tpu_custom_call.1} parent=1 // pred_fallthru
      _
    // Predicated region
    $region38: #{tpu_custom_call.1} parent=1 // pred_check
      _
    $region39: #{tpu_custom_call.1} parent=1 // pred_check_branch
      %187 = sbr.rel (0) target = $region41
    $region40: #{tpu_custom_call.1} parent=1 // pred_region
      %189 = vsyncadd [#allocation11], 0
      %s191 = sshll.u32 [#allocation12], 4
      %s192 = int_to_ptr.vmem [resolvable:$true] %s191
      %s193 = sshll.u32 %s6, 4
      %s194 = int_to_ptr.hbm [resolvable:$true] %s193
      %196 = dma.vmem_to_hbm [thread:$0]  %s192, 256, %s194, [#allocation11]
    $region41: #{tpu_custom_call.1} parent=1 // pred_fallthru
      _
    // Predicated region
    $region42: #{tpu_custom_call.1} parent=1 // pred_check
      _
    $region43: #{tpu_custom_call.1} parent=1 // pred_check_branch
      %198 = sbr.rel (0) target = $region45
    $region44: #{tpu_custom_call.1} parent=1 // pred_region
      %200 = dma.done [#allocation5], 256
    $region45: #{tpu_custom_call.1} parent=1 // pred_fallthru
      _
    // Predicated region
    $region46: #{tpu_custom_call.1} parent=1 // pred_check
      _
    $region47: #{tpu_custom_call.1} parent=1 // pred_check_branch
      %202 = sbr.rel (0) target = $region49
    $region48: #{tpu_custom_call.1} parent=1 // pred_region
      %204 = dma.done [#allocation11], 256
    $region49: #{tpu_custom_call.1} parent=1 // pred_fallthru
      _
    // Predicated region
    $region50: #{tpu_custom_call.1} parent=1 // pred_check
      _
    $region51: #{tpu_custom_call.1} parent=1 // pred_check_branch
      %206 = sbr.rel (0) target = $region53
    $region52: #{tpu_custom_call.1} parent=1 // pred_region
      %208 = dma.done [#allocation11], 256
    $region53: #{tpu_custom_call.1} parent=1 // pred_fallthru
      _
    %209 = vsyncpa [#allocation4], 1
    %210 = vsyncpa [#allocation7], 1
    %211 = vsyncpa [#allocation5], 1
    %212 = vsyncpa [#allocation11], 1

</llo_original>
